<compile_context>
chip_gen: v7x
topology: tpu7x:2x2x1
jax: 0.10.0
libtpu: 0.0.40
codegen_flags: <defaults>
</compile_context>

<pallas_src>
import jax
import jax.numpy as jnp
from jax import lax
from jax.experimental import pallas as pl
from jax.experimental.pallas import tpu as pltpu


def cbam_kernel(x_ref, w1t_ref, b1_ref, a_ref, w2_ref, b2_ref, wsa_ref,
                out_ref, pad_ref):
    """Fused CBAM forward for one batch element (everything stays in VMEM).

    x_ref   : (1, C, H, W)  f32  input tile (NCHW: H on sublanes, W on lanes)
    w1t_ref : (C, 1, Cr)    f32  conv_du[0].weight transposed (w1t[c,0,r] = w1[r,c])
    b1_ref  : (1, Cr)       f32
    a_ref   : (1, 1)        f32  PReLU shared slope
    w2_ref  : (C, 1, Cr)    f32  conv_du[2].weight (w2[k,0,r])
    b2_ref  : (C, 1, 1)     f32
    wsa_ref : (98,)         f32  SMEM: SpatialAttention 7x7 weight, [c, di, dj] order
    out_ref : (1, C, H, W)  f32
    pad_ref : (2, H+6, W+6) f32  VMEM scratch: zero-padded [avg, max] maps
    """
    _, C, H, W = x_ref.shape
    x = x_ref[0]                                                   # (C, H, W)

    # ---- CALayer: global avg pool -> 1x1 conv -> PReLU -> 1x1 conv -> sigmoid ----
    pool = jnp.sum(jnp.sum(x, axis=2, keepdims=True), axis=1, keepdims=True)
    pool = pool * (1.0 / (H * W))                                  # (C, 1, 1)
    # 1x1 conv #1 (C -> Cr): h[0, r] = sum_c w1[r, c] * pool[c]
    # (broadcast-multiply + cross-slab sum; for large C this would become an MXU jnp.dot)
    h = jnp.sum(w1t_ref[...] * pool, axis=0) + b1_ref[...]         # (1, Cr)
    h = jnp.where(h >= 0.0, h, a_ref[...] * h)                     # PReLU
    # 1x1 conv #2 (Cr -> C): y[k] = sum_r w2[k, r] * h[r]
    y = jnp.sum(w2_ref[...] * h[None], axis=2, keepdims=True) + b2_ref[...]   # (C,1,1)
    y = pl.reciprocal(1.0 + jnp.exp(-y))                           # sigmoid (exact recip)

    # CBAM: x1 = ca(x) * x = x * y * x   (single elementwise pass over the tile)
    x1 = x * x * y                                                 # (C, H, W)

    # ---- SpatialAttention input: [mean_c(x1), max_c(x1)] into zero-padded scratch ----
    # Re-zero only the 3-wide halo bands each step (the interior is overwritten below),
    # instead of memset-ing the whole scratch.  Row bands cover the corners; column
    # bands only need the middle H rows.
    zrow = jnp.zeros((3, W + 6), jnp.float32)
    zcol = jnp.zeros((H, 3), jnp.float32)
    for c in range(2):                                             # [avg, max] channels
        pad_ref[c, 0:3, :] = zrow
        pad_ref[c, 3 + H:3 + H + 3, :] = zrow
        pad_ref[c, 3:3 + H, 0:3] = zcol
        pad_ref[c, 3:3 + H, 3 + W:3 + W + 3] = zcol
    pad_ref[0, 3:3 + H, 3:3 + W] = jnp.mean(x1, axis=0)
    pad_ref[1, 3:3 + H, 3:3 + W] = jnp.max(x1, axis=0)

    # ---- 7x7 "same" conv (2 -> 1, no bias) + sigmoid ----
    # fori_loop over the 7 row offsets bounds vreg live ranges (vs. 98 unrolled slices);
    # the 7 column offsets stay static so lane shifts are plain static shifted loads.
    def row_taps(di, acc):
        for c in range(2):                                         # [avg, max] channels
            for dj in range(7):
                wgt = wsa_ref[c * 49 + di * 7 + dj]                # SMEM scalar tap
                acc = acc + wgt * pad_ref[c, pl.ds(di, H), dj:dj + W]
        return acc

    conv = lax.fori_loop(0, 7, row_taps, jnp.zeros((H, W), jnp.float32))
    s = pl.reciprocal(1.0 + jnp.exp(-conv))                        # sigmoid, (H, W)

    # ---- final gate ----
    out_ref[0] = (x1 * s[None]).astype(out_ref.dtype)


def cbam_pallas(x, w1, b1, a, w2, b2, wsa):
    """CBAM forward.

    x: (B, C, H, W); w1: (Cr, C); b1: (Cr,); a: scalar PReLU slope;
    w2: (C, Cr); b2: (C,); wsa: (1, 2, 7, 7) SpatialAttention conv weight.
    """
    B, C, H, W = x.shape
    Cr = w1.shape[0]

    # -- parameter / layout plumbing (host-side glue, negligible) --------------
    x = x.astype(jnp.float32)
    w1t3 = jnp.transpose(w1).reshape(C, 1, Cr).astype(jnp.float32)   # w1t3[c,0,r] = w1[r,c]
    b1r = b1.reshape(1, Cr).astype(jnp.float32)
    a2 = jnp.asarray(a, jnp.float32).reshape(1, 1)
    w23 = w2.reshape(C, 1, Cr).astype(jnp.float32)                   # w23[k,0,r] = w2[k,r]
    b23 = b2.reshape(C, 1, 1).astype(jnp.float32)
    wsa_flat = wsa.reshape(2 * 7 * 7).astype(jnp.float32)            # [c, di, dj] order

    # -- VMEM budget sized to the per-batch tile (double-buffered in/out + scratch) --
    tile_bytes = C * H * W * 4
    scratch_bytes = 2 * (H + 6) * (W + 6) * 4
    needed = 4 * tile_bytes + scratch_bytes + (2 << 20)      # 2x in + 2x out + slack
    vmem_limit = int(min(max(needed, 32 << 20), 64 << 20))   # cap at v7x physical VMEM
    # TODO(synk): for per-batch tiles larger than ~16 MiB (e.g. C=64, 256x256 on v7x),
    # split HW across a second grid axis with a two-pass (pool-accumulate, then
    # gate+conv-with-halo) structure instead of one full (C, H, W) block per batch.
    # TODO(synk): for very small W (<128) the lane dimension is under-utilized; a
    # lane-dense relayout (folding batches/channels into lanes) would help there.

    cost = pl.CostEstimate(
        flops=B * (5 * C * H * W + 2 * 2 * 49 * H * W + 4 * C * Cr),
        transcendentals=B * (C + H * W),
        bytes_accessed=2 * B * C * H * W * 4 + (2 * C * Cr + C + Cr + 99) * 4,
    )

    return pl.pallas_call(
        cbam_kernel,
        out_shape=jax.ShapeDtypeStruct((B, C, H, W), jnp.float32),
        grid=(B,),
        in_specs=[
            pl.BlockSpec((1, C, H, W), lambda b: (b, 0, 0, 0)),
            pl.BlockSpec((C, 1, Cr), lambda b: (0, 0, 0)),
            pl.BlockSpec((1, Cr), lambda b: (0, 0)),
            pl.BlockSpec((1, 1), lambda b: (0, 0)),
            pl.BlockSpec((C, 1, Cr), lambda b: (0, 0, 0)),
            pl.BlockSpec((C, 1, 1), lambda b: (0, 0, 0)),
            pl.BlockSpec(memory_space=pltpu.MemorySpace.SMEM),
        ],
        out_specs=pl.BlockSpec((1, C, H, W), lambda b: (b, 0, 0, 0)),
        scratch_shapes=[pltpu.VMEM((2, H + 6, W + 6), jnp.float32)],
        compiler_params=pltpu.CompilerParams(
            dimension_semantics=("parallel",),   # batches independent (megacore-safe:
            vmem_limit_bytes=vmem_limit,         # the halo is re-established each step)
        ),
        cost_estimate=cost,
    )(x, w1t3, b1r, a2, w23, b23, wsa_flat)


def cbam_ref(x, w1, b1, a, w2, b2, wsa):
    """Pure-JAX reference of the PyTorch forward (for correctness check)."""
    pool = jnp.mean(x, axis=(2, 3))                          # (B, C)
    h = pool @ w1.T + b1[None, :]                            # (B, Cr)
    h = jnp.where(h >= 0.0, h, a * h)                        # PReLU
    y = jax.nn.sigmoid(h @ w2.T + b2[None, :])               # (B, C)
    x1 = (x * y[:, :, None, None]) * x                       # ca(x) * x
    am = jnp.concatenate([jnp.mean(x1, axis=1, keepdims=True),
                          jnp.max(x1, axis=1, keepdims=True)], axis=1)
    s = jax.lax.conv_general_dilated(am, wsa, (1, 1), ((3, 3), (3, 3)),
                                     dimension_numbers=("NCHW", "OIHW", "NCHW"))
    return x1 * jax.nn.sigmoid(s)


if __name__ == "__main__":
    B, C, H, W = 2, 4, 16, 16
    Cr = C // 2
    key = jax.random.PRNGKey(0)
    ks = jax.random.split(key, 6)

    x = jax.random.normal(ks[0], (B, C, H, W), jnp.float32)
    # CALayer.conv_du parameters (1x1 convs -> dense weights), deterministic init
    w1 = jax.random.normal(ks[1], (Cr, C), jnp.float32) * 0.5   # Conv2d(C, C//2, 1).weight
    b1 = jax.random.normal(ks[2], (Cr,), jnp.float32) * 0.1     # .bias
    w2 = jax.random.normal(ks[3], (C, Cr), jnp.float32) * 0.5   # Conv2d(C//2, C, 1).weight
    b2 = jax.random.normal(ks[4], (C,), jnp.float32) * 0.1      # .bias
    a = jnp.float32(0.25)                                       # PReLU default init
    # SpatialAttention conv: Conv2d(2, 1, 7, padding=3, bias=False)
    wsa = jax.random.normal(ks[5], (1, 2, 7, 7), jnp.float32) * 0.2

    out = jax.block_until_ready(cbam_pallas(x, w1, b1, a, w2, b2, wsa))
    ref = cbam_ref(x, w1, b1, a, w2, b2, wsa)

    assert out.shape == (B, C, H, W)
    max_err = float(jnp.max(jnp.abs(out - ref)))
    assert jnp.allclose(out, ref, rtol=1e-4, atol=1e-4), max_err
    print("KERNEL_OK")
</pallas_src>

<mosaic_0001>
module attributes {stable_mosaic.version = 11 : i64} {
  func.func @cbam_kernel(%arg0: i32, %arg1: memref<1x4x16x16xf32, #tpu.memory_space<vmem>>, %arg2: memref<4x1x2xf32, #tpu.memory_space<vmem>>, %arg3: memref<1x2xf32, #tpu.memory_space<vmem>>, %arg4: memref<1x1xf32, #tpu.memory_space<vmem>>, %arg5: memref<4x1x2xf32, #tpu.memory_space<vmem>>, %arg6: memref<4x1x1xf32, #tpu.memory_space<vmem>>, %arg7: memref<98xf32, #tpu.memory_space<smem>>, %arg8: memref<1x4x16x16xf32, #tpu.memory_space<vmem>>, %arg9: memref<2x22x22xf32, #tpu.memory_space<vmem>>) attributes {dimension_semantics = [#tpu.dimension_semantics<parallel>], iteration_bounds = array<i64: 2>, scalar_prefetch = 0 : i64, scratch_operands = 1 : i64, tpu.core_type = #tpu.core_type<tc>, window_params = [{transform_indices = @transform_0, window_bounds = array<i64: 1, 4, 16, 16>}, {pipeline_mode = #tpu.pipeline_mode<synchronous>, transform_indices = @transform_1, window_bounds = array<i64: 4, 1, 2>}, {pipeline_mode = #tpu.pipeline_mode<synchronous>, transform_indices = @transform_2, window_bounds = array<i64: 1, 2>}, {pipeline_mode = #tpu.pipeline_mode<synchronous>, transform_indices = @transform_3, window_bounds = array<i64: 1, 1>}, {pipeline_mode = #tpu.pipeline_mode<synchronous>, transform_indices = @transform_4, window_bounds = array<i64: 4, 1, 2>}, {pipeline_mode = #tpu.pipeline_mode<synchronous>, transform_indices = @transform_5, window_bounds = array<i64: 4, 1, 1>}, {transform_indices = @transform_6, window_bounds = array<i64: 98>}, {transform_indices = @transform_7, window_bounds = array<i64: 1, 4, 16, 16>}]} {
    %c0 = arith.constant 0 : index
    %c0_0 = arith.constant 0 : index
    %c0_1 = arith.constant 0 : index
    %c0_2 = arith.constant 0 : index
    %0 = vector.load %arg1[%c0, %c0_0, %c0_1, %c0_2] : memref<1x4x16x16xf32, #tpu.memory_space<vmem>>, vector<1x4x16x16xf32>
    %1 = vector.shape_cast %0 : vector<1x4x16x16xf32> to vector<4x16x16xf32>
    %cst = arith.constant dense<0.000000e+00> : vector<4x16xf32>
    %2 = vector.multi_reduction <add>, %1, %cst [2] : vector<4x16x16xf32> to vector<4x16xf32>
    %3 = vector.shape_cast %2 : vector<4x16xf32> to vector<4x16x1xf32>
    %cst_3 = arith.constant dense<0.000000e+00> : vector<4x1xf32>
    %4 = vector.multi_reduction <add>, %3, %cst_3 [1] : vector<4x16x1xf32> to vector<4x1xf32>
    %5 = vector.shape_cast %4 : vector<4x1xf32> to vector<4x1x1xf32>
    %cst_4 = arith.constant 3.906250e-03 : f32
    %6 = vector.broadcast %cst_4 : f32 to vector<4x1x1xf32>
    %7 = arith.mulf %5, %6 : vector<4x1x1xf32>
    %c0_5 = arith.constant 0 : index
    %c0_6 = arith.constant 0 : index
    %c0_7 = arith.constant 0 : index
    %8 = vector.load %arg2[%c0_5, %c0_6, %c0_7] : memref<4x1x2xf32, #tpu.memory_space<vmem>>, vector<4x1x2xf32>
    %9 = vector.broadcast %7 : vector<4x1x1xf32> to vector<4x1x2xf32>
    %10 = arith.mulf %8, %9 : vector<4x1x2xf32>
    %cst_8 = arith.constant dense<0.000000e+00> : vector<1x2xf32>
    %11 = vector.multi_reduction <add>, %10, %cst_8 [0] : vector<4x1x2xf32> to vector<1x2xf32>
    %c0_9 = arith.constant 0 : index
    %c0_10 = arith.constant 0 : index
    %12 = vector.load %arg3[%c0_9, %c0_10] : memref<1x2xf32, #tpu.memory_space<vmem>>, vector<1x2xf32>
    %13 = arith.addf %11, %12 : vector<1x2xf32>
    %cst_11 = arith.constant 0.000000e+00 : f32
    %14 = vector.broadcast %cst_11 : f32 to vector<1x2xf32>
    %15 = arith.cmpf oge, %13, %14 : vector<1x2xf32>
    %c0_12 = arith.constant 0 : index
    %c0_13 = arith.constant 0 : index
    %16 = vector.load %arg4[%c0_12, %c0_13] : memref<1x1xf32, #tpu.memory_space<vmem>>, vector<1x1xf32>
    %17 = vector.broadcast %16 : vector<1x1xf32> to vector<1x2xf32>
    %18 = arith.mulf %17, %13 : vector<1x2xf32>
    %19 = arith.select %15, %13, %18 : vector<1x2xi1>, vector<1x2xf32>
    %c0_14 = arith.constant 0 : index
    %c0_15 = arith.constant 0 : index
    %c0_16 = arith.constant 0 : index
    %20 = vector.load %arg5[%c0_14, %c0_15, %c0_16] : memref<4x1x2xf32, #tpu.memory_space<vmem>>, vector<4x1x2xf32>
    %21 = vector.shape_cast %19 : vector<1x2xf32> to vector<1x1x2xf32>
    %22 = vector.broadcast %21 : vector<1x1x2xf32> to vector<4x1x2xf32>
    %23 = arith.mulf %20, %22 : vector<4x1x2xf32>
    %cst_17 = arith.constant dense<0.000000e+00> : vector<4x1xf32>
    %24 = vector.multi_reduction <add>, %23, %cst_17 [2] : vector<4x1x2xf32> to vector<4x1xf32>
    %25 = vector.shape_cast %24 : vector<4x1xf32> to vector<4x1x1xf32>
    %c0_18 = arith.constant 0 : index
    %c0_19 = arith.constant 0 : index
    %c0_20 = arith.constant 0 : index
    %26 = vector.load %arg6[%c0_18, %c0_19, %c0_20] : memref<4x1x1xf32, #tpu.memory_space<vmem>>, vector<4x1x1xf32>
    %27 = arith.addf %25, %26 : vector<4x1x1xf32>
    %cst_21 = arith.constant 0.000000e+00 : f32
    %28 = vector.broadcast %cst_21 : f32 to vector<4x1x1xf32>
    %29 = arith.subf %28, %27 : vector<4x1x1xf32>
    %30 = math.exp %29 : vector<4x1x1xf32>
    %cst_22 = arith.constant 1.000000e+00 : f32
    %31 = vector.broadcast %cst_22 : f32 to vector<4x1x1xf32>
    %32 = arith.addf %31, %30 : vector<4x1x1xf32>
    %33 = tpu.reciprocal %32 : vector<4x1x1xf32> -> vector<4x1x1xf32>
    %34 = arith.mulf %1, %1 : vector<4x16x16xf32>
    %35 = vector.broadcast %33 : vector<4x1x1xf32> to vector<4x16x16xf32>
    %36 = arith.mulf %34, %35 : vector<4x16x16xf32>
    %cst_23 = arith.constant 0.000000e+00 : f32
    %37 = vector.broadcast %cst_23 : f32 to vector<3x22xf32>
    %cst_24 = arith.constant 0.000000e+00 : f32
    %38 = vector.broadcast %cst_24 : f32 to vector<16x3xf32>
    %c0_25 = arith.constant 0 : index
    %c0_26 = arith.constant 0 : index
    %c0_27 = arith.constant 0 : index
    %39 = vector.load %arg9[%c0_25, %c0_26, %c0_27] : memref<2x22x22xf32, #tpu.memory_space<vmem>>, vector<1x3x22xf32>
    %40 = vector.shape_cast %39 : vector<1x3x22xf32> to vector<3x22xf32>
    %41 = vector.shape_cast %37 : vector<3x22xf32> to vector<1x3x22xf32>
    tpu.vector_store %arg9[%c0_25, %c0_26, %c0_27], %41 {strides = array<i32>} : memref<2x22x22xf32, #tpu.memory_space<vmem>>, vector<1x3x22xf32>,
    %c0_28 = arith.constant 0 : index
    %c19 = arith.constant 19 : index
    %c0_29 = arith.constant 0 : index
    %42 = vector.load %arg9[%c0_28, %c19, %c0_29] : memref<2x22x22xf32, #tpu.memory_space<vmem>>, vector<1x3x22xf32>
    %43 = vector.shape_cast %42 : vector<1x3x22xf32> to vector<3x22xf32>
    %44 = vector.shape_cast %37 : vector<3x22xf32> to vector<1x3x22xf32>
    tpu.vector_store %arg9[%c0_28, %c19, %c0_29], %44 {strides = array<i32>} : memref<2x22x22xf32, #tpu.memory_space<vmem>>, vector<1x3x22xf32>,
    %c0_30 = arith.constant 0 : index
    %c3 = arith.constant 3 : index
    %c0_31 = arith.constant 0 : index
    %45 = vector.load %arg9[%c0_30, %c3, %c0_31] : memref<2x22x22xf32, #tpu.memory_space<vmem>>, vector<1x16x3xf32>
    %46 = vector.shape_cast %45 : vector<1x16x3xf32> to vector<16x3xf32>
    %47 = vector.shape_cast %38 : vector<16x3xf32> to vector<1x16x3xf32>
    tpu.vector_store %arg9[%c0_30, %c3, %c0_31], %47 {strides = array<i32>} : memref<2x22x22xf32, #tpu.memory_space<vmem>>, vector<1x16x3xf32>,
    %c0_32 = arith.constant 0 : index
    %c3_33 = arith.constant 3 : index
    %c19_34 = arith.constant 19 : index
    %48 = vector.load %arg9[%c0_32, %c3_33, %c19_34] : memref<2x22x22xf32, #tpu.memory_space<vmem>>, vector<1x16x3xf32>
    %49 = vector.shape_cast %48 : vector<1x16x3xf32> to vector<16x3xf32>
    %50 = vector.shape_cast %38 : vector<16x3xf32> to vector<1x16x3xf32>
    tpu.vector_store %arg9[%c0_32, %c3_33, %c19_34], %50 {strides = array<i32>} : memref<2x22x22xf32, #tpu.memory_space<vmem>>, vector<1x16x3xf32>,
    %c1 = arith.constant 1 : index
    %c0_35 = arith.constant 0 : index
    %c0_36 = arith.constant 0 : index
    %51 = vector.load %arg9[%c1, %c0_35, %c0_36] : memref<2x22x22xf32, #tpu.memory_space<vmem>>, vector<1x3x22xf32>
    %52 = vector.shape_cast %51 : vector<1x3x22xf32> to vector<3x22xf32>
    %53 = vector.shape_cast %37 : vector<3x22xf32> to vector<1x3x22xf32>
    tpu.vector_store %arg9[%c1, %c0_35, %c0_36], %53 {strides = array<i32>} : memref<2x22x22xf32, #tpu.memory_space<vmem>>, vector<1x3x22xf32>,
    %c1_37 = arith.constant 1 : index
    %c19_38 = arith.constant 19 : index
    %c0_39 = arith.constant 0 : index
    %54 = vector.load %arg9[%c1_37, %c19_38, %c0_39] : memref<2x22x22xf32, #tpu.memory_space<vmem>>, vector<1x3x22xf32>
    %55 = vector.shape_cast %54 : vector<1x3x22xf32> to vector<3x22xf32>
    %56 = vector.shape_cast %37 : vector<3x22xf32> to vector<1x3x22xf32>
    tpu.vector_store %arg9[%c1_37, %c19_38, %c0_39], %56 {strides = array<i32>} : memref<2x22x22xf32, #tpu.memory_space<vmem>>, vector<1x3x22xf32>,
    %c1_40 = arith.constant 1 : index
    %c3_41 = arith.constant 3 : index
    %c0_42 = arith.constant 0 : index
    %57 = vector.load %arg9[%c1_40, %c3_41, %c0_42] : memref<2x22x22xf32, #tpu.memory_space<vmem>>, vector<1x16x3xf32>
    %58 = vector.shape_cast %57 : vector<1x16x3xf32> to vector<16x3xf32>
    %59 = vector.shape_cast %38 : vector<16x3xf32> to vector<1x16x3xf32>
    tpu.vector_store %arg9[%c1_40, %c3_41, %c0_42], %59 {strides = array<i32>} : memref<2x22x22xf32, #tpu.memory_space<vmem>>, vector<1x16x3xf32>,
    %c1_43 = arith.constant 1 : index
    %c3_44 = arith.constant 3 : index
    %c19_45 = arith.constant 19 : index
    %60 = vector.load %arg9[%c1_43, %c3_44, %c19_45] : memref<2x22x22xf32, #tpu.memory_space<vmem>>, vector<1x16x3xf32>
    %61 = vector.shape_cast %60 : vector<1x16x3xf32> to vector<16x3xf32>
    %62 = vector.shape_cast %38 : vector<16x3xf32> to vector<1x16x3xf32>
    tpu.vector_store %arg9[%c1_43, %c3_44, %c19_45], %62 {strides = array<i32>} : memref<2x22x22xf32, #tpu.memory_space<vmem>>, vector<1x16x3xf32>,
    %cst_46 = arith.constant dense<0.000000e+00> : vector<16x16xf32>
    %63 = vector.multi_reduction <add>, %36, %cst_46 [0] : vector<4x16x16xf32> to vector<16x16xf32>
    %cst_47 = arith.constant 4.000000e+00 : f32
    %64 = vector.broadcast %cst_47 : f32 to vector<16x16xf32>
    %65 = arith.divf %63, %64 : vector<16x16xf32>
    %c0_48 = arith.constant 0 : index
    %c3_49 = arith.constant 3 : index
    %c3_50 = arith.constant 3 : index
    %66 = vector.load %arg9[%c0_48, %c3_49, %c3_50] : memref<2x22x22xf32, #tpu.memory_space<vmem>>, vector<1x16x16xf32>
    %67 = vector.shape_cast %66 : vector<1x16x16xf32> to vector<16x16xf32>
    %68 = vector.shape_cast %65 : vector<16x16xf32> to vector<1x16x16xf32>
    tpu.vector_store %arg9[%c0_48, %c3_49, %c3_50], %68 {strides = array<i32>} : memref<2x22x22xf32, #tpu.memory_space<vmem>>, vector<1x16x16xf32>,
    %cst_51 = arith.constant dense<0xFF800000> : vector<16x16xf32>
    %69 = vector.multi_reduction <maximumf>, %36, %cst_51 [0] : vector<4x16x16xf32> to vector<16x16xf32>
    %c1_52 = arith.constant 1 : index
    %c3_53 = arith.constant 3 : index
    %c3_54 = arith.constant 3 : index
    %70 = vector.load %arg9[%c1_52, %c3_53, %c3_54] : memref<2x22x22xf32, #tpu.memory_space<vmem>>, vector<1x16x16xf32>
    %71 = vector.shape_cast %70 : vector<1x16x16xf32> to vector<16x16xf32>
    %72 = vector.shape_cast %69 : vector<16x16xf32> to vector<1x16x16xf32>
    tpu.vector_store %arg9[%c1_52, %c3_53, %c3_54], %72 {strides = array<i32>} : memref<2x22x22xf32, #tpu.memory_space<vmem>>, vector<1x16x16xf32>,
    %cst_55 = arith.constant 0.000000e+00 : f32
    %73 = vector.broadcast %cst_55 : f32 to vector<16x16xf32>
    %c0_i32 = arith.constant 0 : i32
    %c7_i32 = arith.constant 7 : i32
    %74 = arith.addi %c0_i32, %c7_i32 : i32
    %c1_i32 = arith.constant 1 : i32
    %75 = scf.for %arg10 = %c0_i32 to %74 step %c1_i32 iter_args(%arg11 = %73) -> (vector<16x16xf32>)  : i32 {
      %c7_i32_63 = arith.constant 7 : i32
      %88 = arith.muli %arg10, %c7_i32_63 : i32
      %c0_i32_64 = arith.constant 0 : i32
      %89 = arith.addi %c0_i32_64, %88 : i32
      %c0_i32_65 = arith.constant 0 : i32
      %90 = arith.addi %89, %c0_i32_65 : i32
      %91 = arith.index_cast %90 : i32 to index
      %92 = memref.load %arg7[%91] : memref<98xf32, #tpu.memory_space<smem>>
      %c0_66 = arith.constant 0 : index
      %93 = arith.index_cast %arg10 : i32 to index
      %c0_67 = arith.constant 0 : index
      %94 = vector.load %arg9[%c0_66, %93, %c0_67] : memref<2x22x22xf32, #tpu.memory_space<vmem>>, vector<1x16x16xf32>
      %95 = vector.shape_cast %94 : vector<1x16x16xf32> to vector<16x16xf32>
      %96 = vector.broadcast %92 : f32 to vector<16x16xf32>
      %97 = arith.mulf %96, %95 : vector<16x16xf32>
      %98 = arith.addf %arg11, %97 : vector<16x16xf32>
      %c7_i32_68 = arith.constant 7 : i32
      %99 = arith.muli %arg10, %c7_i32_68 : i32
      %c0_i32_69 = arith.constant 0 : i32
      %100 = arith.addi %c0_i32_69, %99 : i32
      %c1_i32_70 = arith.constant 1 : i32
      %101 = arith.addi %100, %c1_i32_70 : i32
      %102 = arith.index_cast %101 : i32 to index
      %103 = memref.load %arg7[%102] : memref<98xf32, #tpu.memory_space<smem>>
      %c0_71 = arith.constant 0 : index
      %104 = arith.index_cast %arg10 : i32 to index
      %c1_72 = arith.constant 1 : index
      %105 = vector.load %arg9[%c0_71, %104, %c1_72] : memref<2x22x22xf32, #tpu.memory_space<vmem>>, vector<1x16x16xf32>
      %106 = vector.shape_cast %105 : vector<1x16x16xf32> to vector<16x16xf32>
      %107 = vector.broadcast %103 : f32 to vector<16x16xf32>
      %108 = arith.mulf %107, %106 : vector<16x16xf32>
      %109 = arith.addf %98, %108 : vector<16x16xf32>
      %c7_i32_73 = arith.constant 7 : i32
      %110 = arith.muli %arg10, %c7_i32_73 : i32
      %c0_i32_74 = arith.constant 0 : i32
      %111 = arith.addi %c0_i32_74, %110 : i32
      %c2_i32 = arith.constant 2 : i32
      %112 = arith.addi %111, %c2_i32 : i32
      %113 = arith.index_cast %112 : i32 to index
      %114 = memref.load %arg7[%113] : memref<98xf32, #tpu.memory_space<smem>>
      %c0_75 = arith.constant 0 : index
      %115 = arith.index_cast %arg10 : i32 to index
      %c2 = arith.constant 2 : index
      %116 = vector.load %arg9[%c0_75, %115, %c2] : memref<2x22x22xf32, #tpu.memory_space<vmem>>, vector<1x16x16xf32>
      %117 = vector.shape_cast %116 : vector<1x16x16xf32> to vector<16x16xf32>
      %118 = vector.broadcast %114 : f32 to vector<16x16xf32>
      %119 = arith.mulf %118, %117 : vector<16x16xf32>
      %120 = arith.addf %109, %119 : vector<16x16xf32>
      %c7_i32_76 = arith.constant 7 : i32
      %121 = arith.muli %arg10, %c7_i32_76 : i32
      %c0_i32_77 = arith.constant 0 : i32
      %122 = arith.addi %c0_i32_77, %121 : i32
      %c3_i32 = arith.constant 3 : i32
      %123 = arith.addi %122, %c3_i32 : i32
      %124 = arith.index_cast %123 : i32 to index
      %125 = memref.load %arg7[%124] : memref<98xf32, #tpu.memory_space<smem>>
      %c0_78 = arith.constant 0 : index
      %126 = arith.index_cast %arg10 : i32 to index
      %c3_79 = arith.constant 3 : index
      %127 = vector.load %arg9[%c0_78, %126, %c3_79] : memref<2x22x22xf32, #tpu.memory_space<vmem>>, vector<1x16x16xf32>
      %128 = vector.shape_cast %127 : vector<1x16x16xf32> to vector<16x16xf32>
      %129 = vector.broadcast %125 : f32 to vector<16x16xf32>
      %130 = arith.mulf %129, %128 : vector<16x16xf32>
      %131 = arith.addf %120, %130 : vector<16x16xf32>
      %c7_i32_80 = arith.constant 7 : i32
      %132 = arith.muli %arg10, %c7_i32_80 : i32
      %c0_i32_81 = arith.constant 0 : i32
      %133 = arith.addi %c0_i32_81, %132 : i32
      %c4_i32 = arith.constant 4 : i32
      %134 = arith.addi %133, %c4_i32 : i32
      %135 = arith.index_cast %134 : i32 to index
      %136 = memref.load %arg7[%135] : memref<98xf32, #tpu.memory_space<smem>>
      %c0_82 = arith.constant 0 : index
      %137 = arith.index_cast %arg10 : i32 to index
      %c4 = arith.constant 4 : index
      %138 = vector.load %arg9[%c0_82, %137, %c4] : memref<2x22x22xf32, #tpu.memory_space<vmem>>, vector<1x16x16xf32>
      %139 = vector.shape_cast %138 : vector<1x16x16xf32> to vector<16x16xf32>
      %140 = vector.broadcast %136 : f32 to vector<16x16xf32>
      %141 = arith.mulf %140, %139 : vector<16x16xf32>
      %142 = arith.addf %131, %141 : vector<16x16xf32>
      %c7_i32_83 = arith.constant 7 : i32
      %143 = arith.muli %arg10, %c7_i32_83 : i32
      %c0_i32_84 = arith.constant 0 : i32
      %144 = arith.addi %c0_i32_84, %143 : i32
      %c5_i32 = arith.constant 5 : i32
      %145 = arith.addi %144, %c5_i32 : i32
      %146 = arith.index_cast %145 : i32 to index
      %147 = memref.load %arg7[%146] : memref<98xf32, #tpu.memory_space<smem>>
      %c0_85 = arith.constant 0 : index
      %148 = arith.index_cast %arg10 : i32 to index
      %c5 = arith.constant 5 : index
      %149 = vector.load %arg9[%c0_85, %148, %c5] : memref<2x22x22xf32, #tpu.memory_space<vmem>>, vector<1x16x16xf32>
      %150 = vector.shape_cast %149 : vector<1x16x16xf32> to vector<16x16xf32>
      %151 = vector.broadcast %147 : f32 to vector<16x16xf32>
      %152 = arith.mulf %151, %150 : vector<16x16xf32>
      %153 = arith.addf %142, %152 : vector<16x16xf32>
      %c7_i32_86 = arith.constant 7 : i32
      %154 = arith.muli %arg10, %c7_i32_86 : i32
      %c0_i32_87 = arith.constant 0 : i32
      %155 = arith.addi %c0_i32_87, %154 : i32
      %c6_i32 = arith.constant 6 : i32
      %156 = arith.addi %155, %c6_i32 : i32
      %157 = arith.index_cast %156 : i32 to index
      %158 = memref.load %arg7[%157] : memref<98xf32, #tpu.memory_space<smem>>
      %c0_88 = arith.constant 0 : index
      %159 = arith.index_cast %arg10 : i32 to index
      %c6 = arith.constant 6 : index
      %160 = vector.load %arg9[%c0_88, %159, %c6] : memref<2x22x22xf32, #tpu.memory_space<vmem>>, vector<1x16x16xf32>
      %161 = vector.shape_cast %160 : vector<1x16x16xf32> to vector<16x16xf32>
      %162 = vector.broadcast %158 : f32 to vector<16x16xf32>
      %163 = arith.mulf %162, %161 : vector<16x16xf32>
      %164 = arith.addf %153, %163 : vector<16x16xf32>
      %c7_i32_89 = arith.constant 7 : i32
      %165 = arith.muli %arg10, %c7_i32_89 : i32
      %c49_i32 = arith.constant 49 : i32
      %166 = arith.addi %c49_i32, %165 : i32
      %c0_i32_90 = arith.constant 0 : i32
      %167 = arith.addi %166, %c0_i32_90 : i32
      %168 = arith.index_cast %167 : i32 to index
      %169 = memref.load %arg7[%168] : memref<98xf32, #tpu.memory_space<smem>>
      %c1_91 = arith.constant 1 : index
      %170 = arith.index_cast %arg10 : i32 to index
      %c0_92 = arith.constant 0 : index
      %171 = vector.load %arg9[%c1_91, %170, %c0_92] : memref<2x22x22xf32, #tpu.memory_space<vmem>>, vector<1x16x16xf32>
      %172 = vector.shape_cast %171 : vector<1x16x16xf32> to vector<16x16xf32>
      %173 = vector.broadcast %169 : f32 to vector<16x16xf32>
      %174 = arith.mulf %173, %172 : vector<16x16xf32>
      %175 = arith.addf %164, %174 : vector<16x16xf32>
      %c7_i32_93 = arith.constant 7 : i32
      %176 = arith.muli %arg10, %c7_i32_93 : i32
      %c49_i32_94 = arith.constant 49 : i32
      %177 = arith.addi %c49_i32_94, %176 : i32
      %c1_i32_95 = arith.constant 1 : i32
      %178 = arith.addi %177, %c1_i32_95 : i32
      %179 = arith.index_cast %178 : i32 to index
      %180 = memref.load %arg7[%179] : memref<98xf32, #tpu.memory_space<smem>>
      %c1_96 = arith.constant 1 : index
      %181 = arith.index_cast %arg10 : i32 to index
      %c1_97 = arith.constant 1 : index
      %182 = vector.load %arg9[%c1_96, %181, %c1_97] : memref<2x22x22xf32, #tpu.memory_space<vmem>>, vector<1x16x16xf32>
      %183 = vector.shape_cast %182 : vector<1x16x16xf32> to vector<16x16xf32>
      %184 = vector.broadcast %180 : f32 to vector<16x16xf32>
      %185 = arith.mulf %184, %183 : vector<16x16xf32>
      %186 = arith.addf %175, %185 : vector<16x16xf32>
      %c7_i32_98 = arith.constant 7 : i32
      %187 = arith.muli %arg10, %c7_i32_98 : i32
      %c49_i32_99 = arith.constant 49 : i32
      %188 = arith.addi %c49_i32_99, %187 : i32
      %c2_i32_100 = arith.constant 2 : i32
      %189 = arith.addi %188, %c2_i32_100 : i32
      %190 = arith.index_cast %189 : i32 to index
      %191 = memref.load %arg7[%190] : memref<98xf32, #tpu.memory_space<smem>>
      %c1_101 = arith.constant 1 : index
      %192 = arith.index_cast %arg10 : i32 to index
      %c2_102 = arith.constant 2 : index
      %193 = vector.load %arg9[%c1_101, %192, %c2_102] : memref<2x22x22xf32, #tpu.memory_space<vmem>>, vector<1x16x16xf32>
      %194 = vector.shape_cast %193 : vector<1x16x16xf32> to vector<16x16xf32>
      %195 = vector.broadcast %191 : f32 to vector<16x16xf32>
      %196 = arith.mulf %195, %194 : vector<16x16xf32>
      %197 = arith.addf %186, %196 : vector<16x16xf32>
      %c7_i32_103 = arith.constant 7 : i32
      %198 = arith.muli %arg10, %c7_i32_103 : i32
      %c49_i32_104 = arith.constant 49 : i32
      %199 = arith.addi %c49_i32_104, %198 : i32
      %c3_i32_105 = arith.constant 3 : i32
      %200 = arith.addi %199, %c3_i32_105 : i32
      %201 = arith.index_cast %200 : i32 to index
      %202 = memref.load %arg7[%201] : memref<98xf32, #tpu.memory_space<smem>>
      %c1_106 = arith.constant 1 : index
      %203 = arith.index_cast %arg10 : i32 to index
      %c3_107 = arith.constant 3 : index
      %204 = vector.load %arg9[%c1_106, %203, %c3_107] : memref<2x22x22xf32, #tpu.memory_space<vmem>>, vector<1x16x16xf32>
      %205 = vector.shape_cast %204 : vector<1x16x16xf32> to vector<16x16xf32>
      %206 = vector.broadcast %202 : f32 to vector<16x16xf32>
      %207 = arith.mulf %206, %205 : vector<16x16xf32>
      %208 = arith.addf %197, %207 : vector<16x16xf32>
      %c7_i32_108 = arith.constant 7 : i32
      %209 = arith.muli %arg10, %c7_i32_108 : i32
      %c49_i32_109 = arith.constant 49 : i32
      %210 = arith.addi %c49_i32_109, %209 : i32
      %c4_i32_110 = arith.constant 4 : i32
      %211 = arith.addi %210, %c4_i32_110 : i32
      %212 = arith.index_cast %211 : i32 to index
      %213 = memref.load %arg7[%212] : memref<98xf32, #tpu.memory_space<smem>>
      %c1_111 = arith.constant 1 : index
      %214 = arith.index_cast %arg10 : i32 to index
      %c4_112 = arith.constant 4 : index
      %215 = vector.load %arg9[%c1_111, %214, %c4_112] : memref<2x22x22xf32, #tpu.memory_space<vmem>>, vector<1x16x16xf32>
      %216 = vector.shape_cast %215 : vector<1x16x16xf32> to vector<16x16xf32>
      %217 = vector.broadcast %213 : f32 to vector<16x16xf32>
      %218 = arith.mulf %217, %216 : vector<16x16xf32>
      %219 = arith.addf %208, %218 : vector<16x16xf32>
      %c7_i32_113 = arith.constant 7 : i32
      %220 = arith.muli %arg10, %c7_i32_113 : i32
      %c49_i32_114 = arith.constant 49 : i32
      %221 = arith.addi %c49_i32_114, %220 : i32
      %c5_i32_115 = arith.constant 5 : i32
      %222 = arith.addi %221, %c5_i32_115 : i32
      %223 = arith.index_cast %222 : i32 to index
      %224 = memref.load %arg7[%223] : memref<98xf32, #tpu.memory_space<smem>>
      %c1_116 = arith.constant 1 : index
      %225 = arith.index_cast %arg10 : i32 to index
      %c5_117 = arith.constant 5 : index
      %226 = vector.load %arg9[%c1_116, %225, %c5_117] : memref<2x22x22xf32, #tpu.memory_space<vmem>>, vector<1x16x16xf32>
      %227 = vector.shape_cast %226 : vector<1x16x16xf32> to vector<16x16xf32>
      %228 = vector.broadcast %224 : f32 to vector<16x16xf32>
      %229 = arith.mulf %228, %227 : vector<16x16xf32>
      %230 = arith.addf %219, %229 : vector<16x16xf32>
      %c7_i32_118 = arith.constant 7 : i32
      %231 = arith.muli %arg10, %c7_i32_118 : i32
      %c49_i32_119 = arith.constant 49 : i32
      %232 = arith.addi %c49_i32_119, %231 : i32
      %c6_i32_120 = arith.constant 6 : i32
      %233 = arith.addi %232, %c6_i32_120 : i32
      %234 = arith.index_cast %233 : i32 to index
      %235 = memref.load %arg7[%234] : memref<98xf32, #tpu.memory_space<smem>>
      %c1_121 = arith.constant 1 : index
      %236 = arith.index_cast %arg10 : i32 to index
      %c6_122 = arith.constant 6 : index
      %237 = vector.load %arg9[%c1_121, %236, %c6_122] : memref<2x22x22xf32, #tpu.memory_space<vmem>>, vector<1x16x16xf32>
      %238 = vector.shape_cast %237 : vector<1x16x16xf32> to vector<16x16xf32>
      %239 = vector.broadcast %235 : f32 to vector<16x16xf32>
      %240 = arith.mulf %239, %238 : vector<16x16xf32>
      %241 = arith.addf %230, %240 : vector<16x16xf32>
      scf.yield %241 : vector<16x16xf32>
    }
    %c7_i32_56 = arith.constant 7 : i32
    %cst_57 = arith.constant 0.000000e+00 : f32
    %76 = vector.broadcast %cst_57 : f32 to vector<16x16xf32>
    %77 = arith.subf %76, %75 : vector<16x16xf32>
    %78 = math.exp %77 : vector<16x16xf32>
    %cst_58 = arith.constant 1.000000e+00 : f32
    %79 = vector.broadcast %cst_58 : f32 to vector<16x16xf32>
    %80 = arith.addf %79, %78 : vector<16x16xf32>
    %81 = tpu.reciprocal %80 : vector<16x16xf32> -> vector<16x16xf32>
    %82 = vector.shape_cast %81 : vector<16x16xf32> to vector<1x16x16xf32>
    %83 = vector.broadcast %82 : vector<1x16x16xf32> to vector<4x16x16xf32>
    %84 = arith.mulf %36, %83 : vector<4x16x16xf32>
    %c0_59 = arith.constant 0 : index
    %c0_60 = arith.constant 0 : index
    %c0_61 = arith.constant 0 : index
    %c0_62 = arith.constant 0 : index
    %85 = vector.load %arg8[%c0_59, %c0_60, %c0_61, %c0_62] : memref<1x4x16x16xf32, #tpu.memory_space<vmem>>, vector<1x4x16x16xf32>
    %86 = vector.shape_cast %85 : vector<1x4x16x16xf32> to vector<4x16x16xf32>
    %87 = vector.shape_cast %84 : vector<4x16x16xf32> to vector<1x4x16x16xf32>
    tpu.vector_store %arg8[%c0_59, %c0_60, %c0_61, %c0_62], %87 {strides = array<i32>} : memref<1x4x16x16xf32, #tpu.memory_space<vmem>>, vector<1x4x16x16xf32>,
    return
  }
  func.func @transform_0(%arg0: i32) -> (i32, i32, i32, i32) {
    %c0_i32 = arith.constant 0 : i32
    %c0_i32_0 = arith.constant 0 : i32
    %c0_i32_1 = arith.constant 0 : i32
    %c0_i32_2 = arith.constant 0 : i32
    return %arg0, %c0_i32, %c0_i32_0, %c0_i32_1 : i32, i32, i32, i32
  }
  func.func @transform_1(%arg0: i32) -> (i32, i32, i32) {
    %c0_i32 = arith.constant 0 : i32
    %c0_i32_0 = arith.constant 0 : i32
    %c0_i32_1 = arith.constant 0 : i32
    %c0_i32_2 = arith.constant 0 : i32
    return %c0_i32, %c0_i32_0, %c0_i32_1 : i32, i32, i32
  }
  func.func @transform_2(%arg0: i32) -> (i32, i32) {
    %c0_i32 = arith.constant 0 : i32
    %c0_i32_0 = arith.constant 0 : i32
    %c0_i32_1 = arith.constant 0 : i32
    return %c0_i32, %c0_i32_0 : i32, i32
  }
  func.func @transform_3(%arg0: i32) -> (i32, i32) {
    %c0_i32 = arith.constant 0 : i32
    %c0_i32_0 = arith.constant 0 : i32
    %c0_i32_1 = arith.constant 0 : i32
    return %c0_i32, %c0_i32_0 : i32, i32
  }
  func.func @transform_4(%arg0: i32) -> (i32, i32, i32) {
    %c0_i32 = arith.constant 0 : i32
    %c0_i32_0 = arith.constant 0 : i32
    %c0_i32_1 = arith.constant 0 : i32
    %c0_i32_2 = arith.constant 0 : i32
    return %c0_i32, %c0_i32_0, %c0_i32_1 : i32, i32, i32
  }
  func.func @transform_5(%arg0: i32) -> (i32, i32, i32) {
    %c0_i32 = arith.constant 0 : i32
    %c0_i32_0 = arith.constant 0 : i32
    %c0_i32_1 = arith.constant 0 : i32
    %c0_i32_2 = arith.constant 0 : i32
    return %c0_i32, %c0_i32_0, %c0_i32_1 : i32, i32, i32
  }
  func.func @transform_6(%arg0: i32) -> i32 {
    %c0_i32 = arith.constant 0 : i32
    %c0_i32_0 = arith.constant 0 : i32
    return %c0_i32 : i32
  }
  func.func @transform_7(%arg0: i32) -> (i32, i32, i32, i32) {
    %c0_i32 = arith.constant 0 : i32
    %c0_i32_0 = arith.constant 0 : i32
    %c0_i32_1 = arith.constant 0 : i32
    %c0_i32_2 = arith.constant 0 : i32
    return %arg0, %c0_i32, %c0_i32_0, %c0_i32_1 : i32, i32, i32, i32
  }
}

</mosaic_0001>

<llo_original>
// kernel: tpu_custom_call.1
$region0: #{tpu_custom_call.1}
  #allocation0 [shape = 'u32[]', space=smem, size = 0x4, offset = 0x4, fixed_abs, tag = 'smem constant byte address 0x4 - core index']
  #allocation1 [shape = 'u32[144,128]{1,0:T(1,128)}', space=vmem, size = 0x12000, scoped, tag = 'internal scratch']
  #allocation2 [shape = 'f32[2,22,22]{2,1,0:T(8,128)}', space=vmem, size = 0x6000, scoped, tag = 'scratch operand']
  #allocation3 [shape = 'f32[1,1]{1,0:T(1,128)S(1)}', space=vmem, size = 0x200, scoped, tag = 'scoped memory for tpu_custom_call.1']
  %s0 = inlined_call_operand.hbm [shape: f32[2,4,16,16], index: 0, kind: input, shape index: {}]
  %s1 = inlined_call_operand.vmem [shape: f32[4,1,2], index: 1, kind: input, shape index: {}]
  %s2 = inlined_call_operand.vmem [shape: f32[1,2], index: 2, kind: input, shape index: {}]
  %s3 = inlined_call_operand.<no memory space> [shape: f32[1,1], index: 3, kind: input, shape index: {}]
  %s4 = inlined_call_operand.vmem [shape: f32[4,1,2], index: 4, kind: input, shape index: {}]
  %s5 = inlined_call_operand.vmem [shape: f32[4,1,1], index: 5, kind: input, shape index: {}]
  %s6 = inlined_call_operand.vmem [shape: f32[98], index: 6, kind: input, shape index: {}]
  %s7 = inlined_call_operand.hbm [shape: f32[2,4,16,16], index: 7, kind: output, shape index: {}]
  %s8 = sld [smem:[#allocation0]]
  $region76: #{tpu_custom_call.1} parent=0
    _
  %s10 = ssub.s32 1, %s8
  %s11 = scalar_select 0, %s10, %s8
  %v12 = vstv %s3
  %13 = vst [vmem:[#allocation3] sm:$0x1] %v12
  $region1: #{tpu_custom_call.1} parent=0
    #allocation4 [shape = 'u8[65536]{0}', space=vmem, size = 0x10000, scoped, tag = 'input window, operand 0']
    #allocation5 [shape = 's32[2]{0}', space=sflag, size = 0x8, scoped, tag = 'scoped memory for tpu_custom_call.1']
    #allocation6 [shape = 's32[2]{0}', space=sflag, size = 0x8, scoped, tag = 'scoped memory for tpu_custom_call.1']
    #allocation7 [shape = 's32[2]{0}', space=sflag, size = 0x8, scoped, tag = 'scoped memory for tpu_custom_call.1']
    #allocation8 [shape = 'u8[512]{0}', space=smem, size = 0x200, scoped, tag = 'input window, operand 6, single buffered']
    #allocation9 [shape = 'u8[65536]{0}', space=vmem, size = 0x10000, scoped, tag = 'output window, operand 0']
    %14 = vsyncpa [#allocation5], 0
    %s15 = scalar_lea.sflag [#allocation5], 1
    %16 = vsyncpa %s15, 0
    %17 = vsyncpa [#allocation7], 0
    %18 = vsyncpa [#allocation6], 0
    %s19 = scalar_lea.sflag [#allocation6], 1
    %20 = vsyncpa %s19, 0
    loop: start=0, step=1, limit=4
    $region2: #{tpu_custom_call.1} parent=1 // loop_pre_header
      _
    $region3: #{tpu_custom_call.1} parent=1 // loop_header
      %s22 = sphi 0, %s26
      %p23 = scmp.ge.s32.totalorder %s22, 4
      %s32 = sphi 0, %s34
      %s35 = sphi 0, %s32
      %s36 = sphi 0, %s35
      %s52 = sphi 0, %s36
      %s56 = sphi 0, %s56
      %s58 = sphi 0, %s56
      %s59 = sphi 0, %s58
      %s73 = sphi 0, %s59
      %s77 = sphi 0, %s77
      %s79 = sphi 0, %s77
      %s80 = sphi 0, %s79
      %s94 = sphi 0, %s80
      %s98 = sphi 0, %s98
      %s100 = sphi 0, %s98
      %s101 = sphi 0, %s100
      %s115 = sphi 0, %s101
      %s119 = sphi 0, %s119
      %s121 = sphi 0, %s119
      %s122 = sphi 0, %s121
      %s136 = sphi 0, %s122
      %s140 = sphi 0, %s140
      %s142 = sphi 0, %s140
      %s143 = sphi 0, %s142
      %s157 = sphi 0, %s143
      %s161 = sphi 0, %s161
      %s163 = sphi 0, %s161
      %s164 = sphi 0, %s163
      %s178 = sphi 0, %s164
      %s184 = sphi 0, %s186
      %s187 = sphi 0, %s184
      %s188 = sphi 0, %s187
      %s204 = sphi 0, %s188
    $region4: #{tpu_custom_call.1} parent=1 // loop_header_branch
      %25 = sbr.rel (%p23) target = $region8
    $region5: #{tpu_custom_call.1} parent=1 // loop_body
      %s27 = ssub.s32 %s22, 1
      %s28 = ssub.s32 %s22, 2
      %s29 = sadd.s32 %s22, 1
      %s30 = ssub.s32 %s22, %s29
      %p31 = scmp.eq.s32.totalorder %s30, 0
      %s33 = sadd.s32 %s32, 1
      %s34 = scalar_select %p31, %s32, %s33
      %p37 = pneg %p31
      %p38 = scmp.eq.s32.totalorder %s22, 1
      %p39 = por %p37, %p38
      %p40 = scmp.ne.s32.totalorder %s32, %s35
      %p41 = scmp.eq.s32.totalorder %s22, 0
      %p42 = por %p40, %p41
      %p43 = scmp.ne.s32.totalorder %s32, %s35
      %p44 = scmp.eq.s32.totalorder %s27, 1
      %p45 = por %p43, %p44
      %p46 = scmp.ne.s32.totalorder %s35, %s36
      %p47 = scmp.eq.s32.totalorder %s27, 0
      %p48 = por %p46, %p47
      %p49 = scmp.ne.s32.totalorder %s35, %s36
      %p50 = scmp.eq.s32.totalorder %s28, 1
      %p51 = por %p49, %p50
      %p53 = scmp.ne.s32.totalorder %s36, %s52
      %p54 = scmp.eq.s32.totalorder %s28, 0
      %p55 = por %p53, %p54
      %s57 = sadd.s32 %s56, 1
      %p60 = scmp.eq.s32.totalorder %s22, 1
      %p61 = scmp.ne.s32.totalorder %s56, %s58
      %p62 = scmp.eq.s32.totalorder %s22, 0
      %p63 = por %p61, %p62
      %p64 = scmp.ne.s32.totalorder %s56, %s58
      %p65 = scmp.eq.s32.totalorder %s27, 1
      %p66 = por %p64, %p65
      %p67 = scmp.ne.s32.totalorder %s58, %s59
      %p68 = scmp.eq.s32.totalorder %s27, 0
      %p69 = por %p67, %p68
      %p70 = scmp.ne.s32.totalorder %s58, %s59
      %p71 = scmp.eq.s32.totalorder %s28, 1
      %p72 = por %p70, %p71
      %p74 = scmp.ne.s32.totalorder %s59, %s73
      %p75 = scmp.eq.s32.totalorder %s28, 0
      %p76 = por %p74, %p75
      %s78 = sadd.s32 %s77, 1
      %p81 = scmp.eq.s32.totalorder %s22, 1
      %p82 = scmp.ne.s32.totalorder %s77, %s79
      %p83 = scmp.eq.s32.totalorder %s22, 0
      %p84 = por %p82, %p83
      %p85 = scmp.ne.s32.totalorder %s77, %s79
      %p86 = scmp.eq.s32.totalorder %s27, 1
      %p87 = por %p85, %p86
      %p88 = scmp.ne.s32.totalorder %s79, %s80
      %p89 = scmp.eq.s32.totalorder %s27, 0
      %p90 = por %p88, %p89
      %p91 = scmp.ne.s32.totalorder %s79, %s80
      %p92 = scmp.eq.s32.totalorder %s28, 1
      %p93 = por %p91, %p92
      %p95 = scmp.ne.s32.totalorder %s80, %s94
      %p96 = scmp.eq.s32.totalorder %s28, 0
      %p97 = por %p95, %p96
      %s99 = sadd.s32 %s98, 1
      %p102 = scmp.eq.s32.totalorder %s22, 1
      %p103 = scmp.ne.s32.totalorder %s98, %s100
      %p104 = scmp.eq.s32.totalorder %s22, 0
      %p105 = por %p103, %p104
      %p106 = scmp.ne.s32.totalorder %s98, %s100
      %p107 = scmp.eq.s32.totalorder %s27, 1
      %p108 = por %p106, %p107
      %p109 = scmp.ne.s32.totalorder %s100, %s101
      %p110 = scmp.eq.s32.totalorder %s27, 0
      %p111 = por %p109, %p110
      %p112 = scmp.ne.s32.totalorder %s100, %s101
      %p113 = scmp.eq.s32.totalorder %s28, 1
      %p114 = por %p112, %p113
      %p116 = scmp.ne.s32.totalorder %s101, %s115
      %p117 = scmp.eq.s32.totalorder %s28, 0
      %p118 = por %p116, %p117
      %s120 = sadd.s32 %s119, 1
      %p123 = scmp.eq.s32.totalorder %s22, 1
      %p124 = scmp.ne.s32.totalorder %s119, %s121
      %p125 = scmp.eq.s32.totalorder %s22, 0
      %p126 = por %p124, %p125
      %p127 = scmp.ne.s32.totalorder %s119, %s121
      %p128 = scmp.eq.s32.totalorder %s27, 1
      %p129 = por %p127, %p128
      %p130 = scmp.ne.s32.totalorder %s121, %s122
      %p131 = scmp.eq.s32.totalorder %s27, 0
      %p132 = por %p130, %p131
      %p133 = scmp.ne.s32.totalorder %s121, %s122
      %p134 = scmp.eq.s32.totalorder %s28, 1
      %p135 = por %p133, %p134
      %p137 = scmp.ne.s32.totalorder %s122, %s136
      %p138 = scmp.eq.s32.totalorder %s28, 0
      %p139 = por %p137, %p138
      %s141 = sadd.s32 %s140, 1
      %p144 = scmp.eq.s32.totalorder %s22, 1
      %p145 = scmp.ne.s32.totalorder %s140, %s142
      %p146 = scmp.eq.s32.totalorder %s22, 0
      %p147 = por %p145, %p146
      %p148 = scmp.ne.s32.totalorder %s140, %s142
      %p149 = scmp.eq.s32.totalorder %s27, 1
      %p150 = por %p148, %p149
      %p151 = scmp.ne.s32.totalorder %s142, %s143
      %p152 = scmp.eq.s32.totalorder %s27, 0
      %p153 = por %p151, %p152
      %p154 = scmp.ne.s32.totalorder %s142, %s143
      %p155 = scmp.eq.s32.totalorder %s28, 1
      %p156 = por %p154, %p155
      %p158 = scmp.ne.s32.totalorder %s143, %s157
      %p159 = scmp.eq.s32.totalorder %s28, 0
      %p160 = por %p158, %p159
      %s162 = sadd.s32 %s161, 1
      %p165 = scmp.eq.s32.totalorder %s22, 1
      %p166 = scmp.ne.s32.totalorder %s161, %s163
      %p167 = scmp.eq.s32.totalorder %s22, 0
      %p168 = por %p166, %p167
      %p169 = scmp.ne.s32.totalorder %s161, %s163
      %p170 = scmp.eq.s32.totalorder %s27, 1
      %p171 = por %p169, %p170
      %p172 = scmp.ne.s32.totalorder %s163, %s164
      %p173 = scmp.eq.s32.totalorder %s27, 0
      %p174 = por %p172, %p173
      %p175 = scmp.ne.s32.totalorder %s163, %s164
      %p176 = scmp.eq.s32.totalorder %s28, 1
      %p177 = por %p175, %p176
      %p179 = scmp.ne.s32.totalorder %s164, %s178
      %p180 = scmp.eq.s32.totalorder %s28, 0
      %p181 = por %p179, %p180
      %s182 = ssub.s32 %s22, %s29
      %p183 = scmp.eq.s32.totalorder %s182, 0
      %s185 = sadd.s32 %s184, 1
      %s186 = scalar_select %p183, %s184, %s185
      %p189 = pneg %p183
      %p190 = scmp.eq.s32.totalorder %s22, 1
      %p191 = por %p189, %p190
      %p192 = scmp.ne.s32.totalorder %s184, %s187
      %p193 = scmp.eq.s32.totalorder %s22, 0
      %p194 = por %p192, %p193
      %p195 = scmp.ne.s32.totalorder %s184, %s187
      %p196 = scmp.eq.s32.totalorder %s27, 1
      %p197 = por %p195, %p196
      %p198 = scmp.ne.s32.totalorder %s187, %s188
      %p199 = scmp.eq.s32.totalorder %s27, 0
      %p200 = por %p198, %p199
      %p201 = scmp.ne.s32.totalorder %s187, %s188
      %p202 = scmp.eq.s32.totalorder %s28, 1
      %p203 = por %p201, %p202
      %p205 = scmp.ne.s32.totalorder %s188, %s204
      %p206 = scmp.eq.s32.totalorder %s28, 0
      %p207 = por %p205, %p206
      %p208 = scmp.le.s32.totalorder 1, %s22
      %p209 = scmp.lt.s32.totalorder %s22, 3
      %p210 = pnand %p208, %p209
      %p211 = pneg %p210
      // Predicated region
      $region9: #{tpu_custom_call.1} parent=5 // pred_check
        _
      $region10: #{tpu_custom_call.1} parent=5 // pred_check_branch
        %213 = sbr.rel (%p210) target = $region12
      $region11: #{tpu_custom_call.1} parent=5 // pred_region
        %s214 = ssub.s32 %s22, 1
        // Predicated region
        $region13: #{tpu_custom_call.1} parent=11 // pred_check
          %p215 = pneg %p69
        $region14: #{tpu_custom_call.1} parent=11 // pred_check_branch
          %217 = sbr.rel (%p215) target = $region16
        $region15: #{tpu_custom_call.1} parent=11 // pred_region
          _
        $region16: #{tpu_custom_call.1} parent=11 // pred_fallthru
          _
        // Predicated region
        $region17: #{tpu_custom_call.1} parent=11 // pred_check
          %p218 = pneg %p90
        $region18: #{tpu_custom_call.1} parent=11 // pred_check_branch
          %220 = sbr.rel (%p218) target = $region20
        $region19: #{tpu_custom_call.1} parent=11 // pred_region
          _
        $region20: #{tpu_custom_call.1} parent=11 // pred_fallthru
          _
        // Predicated region
        $region21: #{tpu_custom_call.1} parent=11 // pred_check
          %p221 = pneg %p111
        $region22: #{tpu_custom_call.1} parent=11 // pred_check_branch
          %223 = sbr.rel (%p221) target = $region24
        $region23: #{tpu_custom_call.1} parent=11 // pred_region
          _
        $region24: #{tpu_custom_call.1} parent=11 // pred_fallthru
          _
        // Predicated region
        $region25: #{tpu_custom_call.1} parent=11 // pred_check
          %p224 = pneg %p132
        $region26: #{tpu_custom_call.1} parent=11 // pred_check_branch
          %226 = sbr.rel (%p224) target = $region28
        $region27: #{tpu_custom_call.1} parent=11 // pred_region
          _
        $region28: #{tpu_custom_call.1} parent=11 // pred_fallthru
          _
        // Predicated region
        $region29: #{tpu_custom_call.1} parent=11 // pred_check
          %p227 = pneg %p153
        $region30: #{tpu_custom_call.1} parent=11 // pred_check_branch
          %229 = sbr.rel (%p227) target = $region32
        $region31: #{tpu_custom_call.1} parent=11 // pred_region
          _
        $region32: #{tpu_custom_call.1} parent=11 // pred_fallthru
          _
        // Predicated region
        $region33: #{tpu_custom_call.1} parent=11 // pred_check
          %p230 = pneg %p174
        $region34: #{tpu_custom_call.1} parent=11 // pred_check_branch
          %232 = sbr.rel (%p230) target = $region36
        $region35: #{tpu_custom_call.1} parent=11 // pred_region
          %s234 = ssub.s32 16, 16
          %235 = vsyncadd [#allocation7], %s234
          %s237 = sshll.u32 %s6, 4
          %s238 = int_to_ptr.vmem [resolvable:$true] %s237
          %240 = dma.vmem_to_smem %s238, 16, [#allocation8], [#allocation7]
        $region36: #{tpu_custom_call.1} parent=11 // pred_fallthru
          _
      $region12: #{tpu_custom_call.1} parent=5 // pred_fallthru
        _
      %p241 = scmp.lt.s32.totalorder %s22, 2
      // Predicated region
      $region37: #{tpu_custom_call.1} parent=5 // pred_check
        %p242 = pneg %p241
      $region38: #{tpu_custom_call.1} parent=5 // pred_check_branch
        %244 = sbr.rel (%p242) target = $region40
      $region39: #{tpu_custom_call.1} parent=5 // pred_region
        // Predicated region
        $region41: #{tpu_custom_call.1} parent=39 // pred_check
          %p245 = pneg %p42
        $region42: #{tpu_custom_call.1} parent=39 // pred_check_branch
          %247 = sbr.rel (%p245) target = $region44
        $region43: #{tpu_custom_call.1} parent=39 // pred_region
          %s248 = sand.u32 %s32, 1
          %s249 = scalar_lea.sflag [#allocation5], %s248
          %s250 = sand.u32 %s32, 1
          %s251 = smul.addr %s250, 64
          %s252 = scalar_lea.vmem [#allocation4], %s251
          %s254 = ssub.s32 1024, 1024
          %255 = vsyncadd %s249, %s254
          %s256 = smul.addr %s22, 8
          %s257 = smul.addr %s256, 128
          %s258 = scalar_lea.hbm %s0, %s257
          %s259 = sshll.u32 %s252, 4
          %s260 = int_to_ptr.vmem [resolvable:$true] %s259
          %265 = dma.hbm_to_vmem [thread:$0]  %s258, 1024, %s260, %s249, 128, 128, 8
        $region44: #{tpu_custom_call.1} parent=39 // pred_fallthru
          _
      $region40: #{tpu_custom_call.1} parent=5 // pred_fallthru
        _
      %p266 = scmp.le.s32.totalorder 1, %s22
      %p267 = scmp.lt.s32.totalorder %s22, 3
      %p268 = pnand %p266, %p267
      %p269 = pneg %p268
      // Predicated region
      $region45: #{tpu_custom_call.1} parent=5 // pred_check
        _
      $region46: #{tpu_custom_call.1} parent=5 // pred_check_branch
        %271 = sbr.rel (%p268) target = $region48
      $region47: #{tpu_custom_call.1} parent=5 // pred_region
        %s272 = ssub.s32 %s22, 1
        %s273 = sand.u32 %s35, 1
        %s274 = scalar_lea.sflag [#allocation5], %s273
        %s275 = sand.u32 %s35, 1
        %s276 = smul.addr %s275, 64
        %s277 = scalar_lea.vmem [#allocation4], %s276
        // Predicated region
        $region49: #{tpu_custom_call.1} parent=47 // pred_check
          %p278 = pneg %p48
        $region50: #{tpu_custom_call.1} parent=47 // pred_check_branch
          %280 = sbr.rel (%p278) target = $region52
        $region51: #{tpu_custom_call.1} parent=47 // pred_region
          %281 = dma.done %s274, 1024
        $region52: #{tpu_custom_call.1} parent=47 // pred_fallthru
          _
        // Predicated region
        $region53: #{tpu_custom_call.1} parent=47 // pred_check
          %p282 = pneg %p174
        $region54: #{tpu_custom_call.1} parent=47 // pred_check_branch
          %284 = sbr.rel (%p282) target = $region56
        $region55: #{tpu_custom_call.1} parent=47 // pred_region
          %285 = dma.done [#allocation7], 16
        $region56: #{tpu_custom_call.1} parent=47 // pred_fallthru
          _
        %286 = sfence
        %s287 = sand.u32 %s35, 1
        %s288 = scalar_lea.sflag [#allocation5], %s287
        %s289 = sand.u32 %s35, 1
        %s290 = smul.addr %s289, 64
        %s291 = scalar_lea.vmem [#allocation4], %s290
        %p292 = pneg %p48
        %p293 = pneg %p45
        %p294 = pneg %p69
        %p295 = pneg %p66
        %p296 = pneg %p90
        %p297 = pneg %p87
        %p298 = pneg %p111
        %p299 = pneg %p108
        %p300 = pneg %p132
        %p301 = pneg %p129
        %p302 = pneg %p153
        %p303 = pneg %p150
        %p304 = pneg %p174
        %p305 = pneg %p171
        %p306 = pneg %p200
        %p307 = pneg %p197
        %s308 = sand.u32 %s187, 1
        %s309 = scalar_lea.sflag [#allocation6], %s308
        %s310 = sand.u32 %s187, 1
        %s311 = smul.addr %s310, 64
        %s312 = scalar_lea.vmem [#allocation9], %s311
        %v313 = vld [vmem:[%s277] sm:$0xff]
        %v314 = vld [vmem:[%s277 + $0x8] sm:$0xff]
        %v315 = vld [vmem:[%s277 + $0x10] sm:$0xff]
        %v316 = vld [vmem:[%s277 + $0x18] sm:$0xff]
        %v317 = vld [vmem:[%s277 + $0x20] sm:$0xff]
        %v318 = vld [vmem:[%s277 + $0x28] sm:$0xff]
        %v319 = vld [vmem:[%s277 + $0x30] sm:$0xff]
        %v320 = vld [vmem:[%s277 + $0x38] sm:$0xff]
        %vm321 = vcmask 130048
        %v322 = vsel %vm321, %v313, 0.0
        %323 = vadd.xlane.f32.xlu0 %v322
        %v324 = vpop.xlane.xlu0 %323
        %v325 = vsel %vm321, %v314, 0.0
        %326 = vadd.xlane.f32.xlu0 %v325
        %v327 = vpop.xlane.xlu0 %326
        %v328 = vsel %vm321, %v315, 0.0
        %329 = vadd.xlane.f32.xlu0 %v328
        %v330 = vpop.xlane.xlu0 %329
        %v331 = vsel %vm321, %v316, 0.0
        %332 = vadd.xlane.f32.xlu0 %v331
        %v333 = vpop.xlane.xlu0 %332
        %v334 = vsel %vm321, %v317, 0.0
        %335 = vadd.xlane.f32.xlu0 %v334
        %v336 = vpop.xlane.xlu0 %335
        %v337 = vsel %vm321, %v318, 0.0
        %338 = vadd.xlane.f32.xlu0 %v337
        %v339 = vpop.xlane.xlu0 %338
        %v340 = vsel %vm321, %v319, 0.0
        %341 = vadd.xlane.f32.xlu0 %v340
        %v342 = vpop.xlane.xlu0 %341
        %v343 = vsel %vm321, %v320, 0.0
        %344 = vadd.xlane.f32.xlu0 %v343
        %v345 = vpop.xlane.xlu0 %344
        %v346 = vadd.f32 %v324, %v327
        %v347 = vrot.slane %v346, 4
        %v348 = vadd.f32 %v346, %v347
        %v349 = vrot.slane %v348, 2
        %v350 = vadd.f32 %v348, %v349
        %v351 = vrot.slane %v350, 1
        %v352 = vadd.f32 %v350, %v351
        %v353 = vadd.f32 %v330, %v333
        %v354 = vrot.slane %v353, 4
        %v355 = vadd.f32 %v353, %v354
        %v356 = vrot.slane %v355, 2
        %v357 = vadd.f32 %v355, %v356
        %v358 = vrot.slane %v357, 1
        %v359 = vadd.f32 %v357, %v358
        %v360 = vadd.f32 %v336, %v339
        %v361 = vrot.slane %v360, 4
        %v362 = vadd.f32 %v360, %v361
        %v363 = vrot.slane %v362, 2
        %v364 = vadd.f32 %v362, %v363
        %v365 = vrot.slane %v364, 1
        %v366 = vadd.f32 %v364, %v365
        %v367 = vadd.f32 %v342, %v345
        %v368 = vrot.slane %v367, 4
        %v369 = vadd.f32 %v367, %v368
        %v370 = vrot.slane %v369, 2
        %v371 = vadd.f32 %v369, %v370
        %v372 = vrot.slane %v371, 1
        %v373 = vadd.f32 %v371, %v372
        %v374 = vmul.f32 %v352, 0.00390625
        %v375 = vmul.f32 %v359, 0.00390625
        %v376 = vmul.f32 %v366, 0.00390625
        %v377 = vmul.f32 %v373, 0.00390625
        %v378 = vld [vmem:[%s1] sm:$0x1]
        %v379 = vld [vmem:[%s1 + $0x1] sm:$0x1]
        %v380 = vld [vmem:[%s1 + $0x2] sm:$0x1]
        %v381 = vld [vmem:[%s1 + $0x3] sm:$0x1]
        %v382 = vmul.f32 %v378, %v374
        %v383 = vmul.f32 %v379, %v375
        %v384 = vmul.f32 %v380, %v376
        %v385 = vmul.f32 %v381, %v377
        %vm386 = vcmask 8192
        %v387 = vsel %vm386, %v382, 0.0
        %v388 = vsel %vm386, %v383, 0.0
        %v389 = vadd.f32 %v387, %v388
        %v390 = vsel %vm386, %v384, 0.0
        %v391 = vadd.f32 %v389, %v390
        %v392 = vsel %vm386, %v385, 0.0
        %v393 = vadd.f32 %v391, %v392
        %v394 = vld [vmem:[%s2] sm:$0x1]
        %v395 = vadd.f32 %v393, %v394
        %vm396 = vcmp.ge.f32.partialorder %v395, 0.0
        %v397 = vld [vmem:[#allocation3] sm:$0x1]
        %399 = vset.pattern.permute.xlu0 0
        %400 = vperm.xlu0 %399, %v397
        %v401 = vpop.permute.xlu0 %400
        %v403 = vlaneseq
        %v404 = vshrl.u32 %v403, 7
        %v405 = vsub.s32 0, %v404
        %v406 = vrot.slane %v401, %v405
        %v407 = vmul.f32 %v406, %v395
        %v408 = vsel %vm396, %v395, %v407
        %v409 = vld [vmem:[%s4] sm:$0x1]
        %v410 = vld [vmem:[%s4 + $0x1] sm:$0x1]
        %v411 = vld [vmem:[%s4 + $0x2] sm:$0x1]
        %v412 = vld [vmem:[%s4 + $0x3] sm:$0x1]
        %v413 = vmul.f32 %v409, %v408
        %v414 = vmul.f32 %v410, %v408
        %v415 = vmul.f32 %v411, %v408
        %v416 = vmul.f32 %v412, %v408
        %v417 = vsel %vm386, %v413, 0.0
        %418 = vadd.xlane.f32.xlu0 %v417
        %v419 = vpop.xlane.xlu0 %418
        %v420 = vsel %vm386, %v414, 0.0
        %421 = vadd.xlane.f32.xlu0 %v420
        %v422 = vpop.xlane.xlu0 %421
        %v423 = vsel %vm386, %v415, 0.0
        %424 = vadd.xlane.f32.xlu0 %v423
        %v425 = vpop.xlane.xlu0 %424
        %v426 = vsel %vm386, %v416, 0.0
        %427 = vadd.xlane.f32.xlu0 %v426
        %v428 = vpop.xlane.xlu0 %427
        %v429 = vld [vmem:[%s5] sm:$0x1]
        %v430 = vld [vmem:[%s5 + $0x1] sm:$0x1]
        %v431 = vld [vmem:[%s5 + $0x2] sm:$0x1]
        %v432 = vld [vmem:[%s5 + $0x3] sm:$0x1]
        %v433 = vadd.f32 %v419, %v429
        %v434 = vadd.f32 %v422, %v430
        %v435 = vadd.f32 %v425, %v431
        %v436 = vadd.f32 %v428, %v432
        %v437 = vsub.f32 0.0, %v433
        %v438 = vsub.f32 0.0, %v434
        %v439 = vsub.f32 0.0, %v435
        %v440 = vsub.f32 0.0, %v436
        %v441 = vmul.f32 %v437, 1.442695
        %v442 = vpow.pop %v441
        %v443 = vmul.f32 %v438, 1.442695
        %v444 = vpow.pop %v443
        %v445 = vmul.f32 %v439, 1.442695
        %v446 = vpow.pop %v445
        %v447 = vmul.f32 %v440, 1.442695
        %v448 = vpow.pop %v447
        %v449 = vadd.f32 %v442, 1.0
        %v450 = vadd.f32 %v444, 1.0
        %v451 = vadd.f32 %v446, 1.0
        %v452 = vadd.f32 %v448, 1.0
        %v453 = vrcp.pop %v449
        %v454 = vrcp.pop %v450
        %v455 = vrcp.pop %v451
        %v456 = vrcp.pop %v452
        %v457 = vmul.f32 %v313, %v313
        %v458 = vmul.f32 %v314, %v314
        %v459 = vmul.f32 %v315, %v315
        %v460 = vmul.f32 %v316, %v316
        %v461 = vmul.f32 %v317, %v317
        %v462 = vmul.f32 %v318, %v318
        %v463 = vmul.f32 %v319, %v319
        %v464 = vmul.f32 %v320, %v320
        %s466 = vtos %v453
        %v467 = vstv %s466
        %s470 = vtos %v454
        %v471 = vstv %s470
        %s474 = vtos %v455
        %v475 = vstv %s474
        %s478 = vtos %v456
        %v479 = vstv %s478
        %v481 = vmul.f32 %v457, %v467
        %v482 = vmul.f32 %v458, %v467
        %v483 = vmul.f32 %v459, %v471
        %v484 = vmul.f32 %v460, %v471
        %v485 = vmul.f32 %v461, %v475
        %v486 = vmul.f32 %v462, %v475
        %v487 = vmul.f32 %v463, %v479
        %v488 = vmul.f32 %v464, %v479
        %vm489 = vcmask 174080
        %490 = vst.msk [vmem:[#allocation2] sm:$0x7] %vm489, 0.0
        %491 = vst.msk [vmem:[#allocation2 + $0x13] sm:$0x7] %vm489, 0.0
        %vm492 = vcmask 23552
        %493 = vst.msk [vmem:[#allocation2 + $0x3] sm:$0xff] %vm492, 0.0
        %494 = vst.msk [vmem:[#allocation2 + $0xb] sm:$0xff] %vm492, 0.0
        %vm495 = vcmask 179352
        %496 = vst.msk [vmem:[#allocation2 + $0x3] sm:$0xff] %vm495, 0.0
        %497 = vst.msk [vmem:[#allocation2 + $0xb] sm:$0xff] %vm495, 0.0
        %s498 = scalar_lea.vmem [#allocation2], 24
        %499 = vst.msk [vmem:[%s498] sm:$0x7] %vm489, 0.0
        %500 = vst.msk [vmem:[%s498 + $0x13] sm:$0x7] %vm489, 0.0
        %501 = vst.msk [vmem:[%s498 + $0x3] sm:$0xff] %vm492, 0.0
        %502 = vst.msk [vmem:[%s498 + $0xb] sm:$0xff] %vm492, 0.0
        %503 = vst.msk [vmem:[%s498 + $0x3] sm:$0xff] %vm495, 0.0
        %504 = vst.msk [vmem:[%s498 + $0xb] sm:$0xff] %vm495, 0.0
        %v505 = vsel %vm321, %v481, 0.0
        %v506 = vsel %vm321, %v483, 0.0
        %v507 = vadd.f32 %v505, %v506
        %v508 = vsel %vm321, %v485, 0.0
        %v509 = vadd.f32 %v507, %v508
        %v510 = vsel %vm321, %v487, 0.0
        %v511 = vadd.f32 %v509, %v510
        %v512 = vsel %vm321, %v482, 0.0
        %v513 = vsel %vm321, %v484, 0.0
        %v514 = vadd.f32 %v512, %v513
        %v515 = vsel %vm321, %v486, 0.0
        %v516 = vadd.f32 %v514, %v515
        %v517 = vsel %vm321, %v488, 0.0
        %v518 = vadd.f32 %v516, %v517
        %v519 = vrcp.pop 4.0
        %v520 = vmul.f32 %v511, %v519
        %v521 = vmul.f32 %v518, %v519
        %524 = vrot.lane.b32.xlu0 %v520, 3
        %v525 = vpop.permute.xlu0 %524
        %526 = vrot.lane.b32.xlu0 %v521, 3
        %v527 = vpop.permute.xlu0 %526
        %vm530 = vcmask 154648
        %531 = vst.msk [vmem:[#allocation2 + $0x3] sm:$0xff] %vm530, %v525
        %532 = vst.msk [vmem:[#allocation2 + $0xb] sm:$0xff] %vm530, %v527
        %v533 = vsel %vm321, %v481, -inf
        %v534 = vsel %vm321, %v483, -inf
        %v535 = vsel %vm321, %v485, -inf
        %v536 = vmax.f32 %v533, %v535
        %v537 = vsel %vm321, %v487, -inf
        %v538 = vmax.f32 %v534, %v537
        %v539 = vmax.f32 %v536, %v538
        %v540 = vsel %vm321, %v482, -inf
        %v541 = vsel %vm321, %v484, -inf
        %v542 = vsel %vm321, %v486, -inf
        %v543 = vmax.f32 %v540, %v542
        %v544 = vsel %vm321, %v488, -inf
        %v545 = vmax.f32 %v541, %v544
        %v546 = vmax.f32 %v543, %v545
        %549 = vrot.lane.b32.xlu0 %v539, 3
        %v550 = vpop.permute.xlu0 %549
        %551 = vrot.lane.b32.xlu0 %v546, 3
        %v552 = vpop.permute.xlu0 %551
        %555 = vst.msk [vmem:[%s498 + $0x3] sm:$0xff] %vm530, %v550
        %556 = vst.msk [vmem:[%s498 + $0xb] sm:$0xff] %vm530, %v552
        loop: start=0, step=1, limit=7
        $region57: #{tpu_custom_call.1} parent=47 // loop_pre_header
          _
        $region58: #{tpu_custom_call.1} parent=47 // loop_header
          %s558 = sphi 0, %s562
          %p559 = scmp.ge.s32.totalorder %s558, 7
          %v563 = vphi 0.0, %v764
          %v564 = vphi 0.0, %v765
        $region59: #{tpu_custom_call.1} parent=47 // loop_header_branch
          %561 = sbr.rel (%p559) target = $region63
        $region60: #{tpu_custom_call.1} parent=47 // loop_body
          %s565 = smul.u32 %s558, 7
          %s566 = sld [smem:[#allocation8 + %s565]]
          %s567 = scalar_lea.vmem [#allocation2], %s558
          %v568 = vld [vmem:[%s567] sm:$0xff]
          %v569 = vld [vmem:[%s567 + $0x8] sm:$0xff]
          %v570 = vstv %s566
          %v571 = vmul.f32 %v570, %v568
          %v572 = vmul.f32 %v570, %v569
          %v573 = vadd.f32 %v563, %v571
          %v574 = vadd.f32 %v564, %v572
          %s575 = sadd.s32 %s565, 1
          %s576 = sld [smem:[#allocation8 + %s575]]
          %v577 = vstv %s576
          %v578 = vmul.f32 %v577, %v568
          %v579 = vmul.f32 %v577, %v569
          %582 = vrot.lane.b32.xlu0 %v578, 127
          %v583 = vpop.permute.xlu0 %582
          %584 = vrot.lane.b32.xlu0 %v579, 127
          %v585 = vpop.permute.xlu0 %584
          %v588 = vadd.f32 %v573, %v583
          %v589 = vadd.f32 %v574, %v585
          %s590 = sadd.s32 %s565, 2
          %s591 = sld [smem:[#allocation8 + %s590]]
          %v592 = vstv %s591
          %v593 = vmul.f32 %v592, %v568
          %v594 = vmul.f32 %v592, %v569
          %597 = vrot.lane.b32.xlu0 %v593, 126
          %v598 = vpop.permute.xlu0 %597
          %599 = vrot.lane.b32.xlu0 %v594, 126
          %v600 = vpop.permute.xlu0 %599
          %v603 = vadd.f32 %v588, %v598
          %v604 = vadd.f32 %v589, %v600
          %s605 = sadd.s32 %s565, 3
          %s606 = sld [smem:[#allocation8 + %s605]]
          %v607 = vstv %s606
          %v608 = vmul.f32 %v607, %v568
          %v609 = vmul.f32 %v607, %v569
          %612 = vrot.lane.b32.xlu0 %v608, 125
          %v613 = vpop.permute.xlu0 %612
          %614 = vrot.lane.b32.xlu0 %v609, 125
          %v615 = vpop.permute.xlu0 %614
          %v618 = vadd.f32 %v603, %v613
          %v619 = vadd.f32 %v604, %v615
          %s620 = sadd.s32 %s565, 4
          %s621 = sld [smem:[#allocation8 + %s620]]
          %v622 = vstv %s621
          %v623 = vmul.f32 %v622, %v568
          %v624 = vmul.f32 %v622, %v569
          %627 = vrot.lane.b32.xlu0 %v623, 124
          %v628 = vpop.permute.xlu0 %627
          %629 = vrot.lane.b32.xlu0 %v624, 124
          %v630 = vpop.permute.xlu0 %629
          %v633 = vadd.f32 %v618, %v628
          %v634 = vadd.f32 %v619, %v630
          %s635 = sadd.s32 %s565, 5
          %s636 = sld [smem:[#allocation8 + %s635]]
          %v637 = vstv %s636
          %v638 = vmul.f32 %v637, %v568
          %v639 = vmul.f32 %v637, %v569
          %642 = vrot.lane.b32.xlu0 %v638, 123
          %v643 = vpop.permute.xlu0 %642
          %644 = vrot.lane.b32.xlu0 %v639, 123
          %v645 = vpop.permute.xlu0 %644
          %v648 = vadd.f32 %v633, %v643
          %v649 = vadd.f32 %v634, %v645
          %s650 = sadd.s32 %s565, 6
          %s651 = sld [smem:[#allocation8 + %s650]]
          %v652 = vstv %s651
          %v653 = vmul.f32 %v652, %v568
          %v654 = vmul.f32 %v652, %v569
          %657 = vrot.lane.b32.xlu0 %v653, 122
          %v658 = vpop.permute.xlu0 %657
          %659 = vrot.lane.b32.xlu0 %v654, 122
          %v660 = vpop.permute.xlu0 %659
          %v663 = vadd.f32 %v648, %v658
          %v664 = vadd.f32 %v649, %v660
          %s665 = sadd.s32 %s565, 49
          %s666 = sld [smem:[#allocation8 + %s665]]
          %s667 = sadd.s32 %s558, 24
          %s668 = scalar_lea.vmem [#allocation2], %s667
          %v669 = vld [vmem:[%s668] sm:$0xff]
          %v670 = vld [vmem:[%s668 + $0x8] sm:$0xff]
          %v671 = vstv %s666
          %v672 = vmul.f32 %v671, %v669
          %v673 = vmul.f32 %v671, %v670
          %v674 = vadd.f32 %v663, %v672
          %v675 = vadd.f32 %v664, %v673
          %s676 = sadd.s32 %s565, 50
          %s677 = sld [smem:[#allocation8 + %s676]]
          %v678 = vstv %s677
          %v679 = vmul.f32 %v678, %v669
          %v680 = vmul.f32 %v678, %v670
          %683 = vrot.lane.b32.xlu0 %v679, 127
          %v684 = vpop.permute.xlu0 %683
          %685 = vrot.lane.b32.xlu0 %v680, 127
          %v686 = vpop.permute.xlu0 %685
          %v689 = vadd.f32 %v674, %v684
          %v690 = vadd.f32 %v675, %v686
          %s691 = sadd.s32 %s565, 51
          %s692 = sld [smem:[#allocation8 + %s691]]
          %v693 = vstv %s692
          %v694 = vmul.f32 %v693, %v669
          %v695 = vmul.f32 %v693, %v670
          %698 = vrot.lane.b32.xlu0 %v694, 126
          %v699 = vpop.permute.xlu0 %698
          %700 = vrot.lane.b32.xlu0 %v695, 126
          %v701 = vpop.permute.xlu0 %700
          %v704 = vadd.f32 %v689, %v699
          %v705 = vadd.f32 %v690, %v701
          %s706 = sadd.s32 %s565, 52
          %s707 = sld [smem:[#allocation8 + %s706]]
          %v708 = vstv %s707
          %v709 = vmul.f32 %v708, %v669
          %v710 = vmul.f32 %v708, %v670
          %713 = vrot.lane.b32.xlu0 %v709, 125
          %v714 = vpop.permute.xlu0 %713
          %715 = vrot.lane.b32.xlu0 %v710, 125
          %v716 = vpop.permute.xlu0 %715
          %v719 = vadd.f32 %v704, %v714
          %v720 = vadd.f32 %v705, %v716
          %s721 = sadd.s32 %s565, 53
          %s722 = sld [smem:[#allocation8 + %s721]]
          %v723 = vstv %s722
          %v724 = vmul.f32 %v723, %v669
          %v725 = vmul.f32 %v723, %v670
          %728 = vrot.lane.b32.xlu0 %v724, 124
          %v729 = vpop.permute.xlu0 %728
          %730 = vrot.lane.b32.xlu0 %v725, 124
          %v731 = vpop.permute.xlu0 %730
          %v734 = vadd.f32 %v719, %v729
          %v735 = vadd.f32 %v720, %v731
          %s736 = sadd.s32 %s565, 54
          %s737 = sld [smem:[#allocation8 + %s736]]
          %v738 = vstv %s737
          %v739 = vmul.f32 %v738, %v669
          %v740 = vmul.f32 %v738, %v670
          %743 = vrot.lane.b32.xlu0 %v739, 123
          %v744 = vpop.permute.xlu0 %743
          %745 = vrot.lane.b32.xlu0 %v740, 123
          %v746 = vpop.permute.xlu0 %745
          %v749 = vadd.f32 %v734, %v744
          %v750 = vadd.f32 %v735, %v746
          %s751 = sadd.s32 %s565, 55
          %s752 = sld [smem:[#allocation8 + %s751]]
          %v753 = vstv %s752
          %v754 = vmul.f32 %v753, %v669
          %v755 = vmul.f32 %v753, %v670
          %758 = vrot.lane.b32.xlu0 %v754, 122
          %v759 = vpop.permute.xlu0 %758
          %760 = vrot.lane.b32.xlu0 %v755, 122
          %v761 = vpop.permute.xlu0 %760
          %v764 = vadd.f32 %v749, %v759
          %v765 = vadd.f32 %v750, %v761
        $region61: #{tpu_custom_call.1} parent=47 // loop_footer
          %s562 = sadd.s32 1, %s558
        $region62: #{tpu_custom_call.1} parent=47 // loop_footer_branch
          %557 = sbr.rel target = $region58
        $region63: #{tpu_custom_call.1} parent=47 // loop_exit
          _
        %v766 = vsub.f32 0.0, %v563
        %v767 = vsub.f32 0.0, %v564
        %v768 = vmul.f32 %v766, 1.442695
        %v769 = vpow.pop %v768
        %v770 = vmul.f32 %v767, 1.442695
        %v771 = vpow.pop %v770
        %v772 = vadd.f32 %v769, 1.0
        %v773 = vadd.f32 %v771, 1.0
        %v774 = vrcp.pop %v772
        %v775 = vrcp.pop %v773
        %v776 = vmul.f32 %v481, %v774
        %v777 = vmul.f32 %v482, %v775
        %v778 = vmul.f32 %v483, %v774
        %v779 = vmul.f32 %v484, %v775
        %v780 = vmul.f32 %v485, %v774
        %v781 = vmul.f32 %v486, %v775
        %v782 = vmul.f32 %v487, %v774
        %v783 = vmul.f32 %v488, %v775
        %784 = vst.msk [vmem:[%s312] sm:$0xff] %vm321, %v776
        %785 = vst.msk [vmem:[%s312 + $0x8] sm:$0xff] %vm321, %v777
        %786 = vst.msk [vmem:[%s312 + $0x10] sm:$0xff] %vm321, %v778
        %787 = vst.msk [vmem:[%s312 + $0x18] sm:$0xff] %vm321, %v779
        %788 = vst.msk [vmem:[%s312 + $0x20] sm:$0xff] %vm321, %v780
        %789 = vst.msk [vmem:[%s312 + $0x28] sm:$0xff] %vm321, %v781
        %790 = vst.msk [vmem:[%s312 + $0x30] sm:$0xff] %vm321, %v782
        %791 = vst.msk [vmem:[%s312 + $0x38] sm:$0xff] %vm321, %v783
        %s792 = sand.u32 %s187, 1
        %s793 = scalar_lea.sflag [#allocation6], %s792
        %s794 = sand.u32 %s187, 1
        %s795 = smul.addr %s794, 64
        %s796 = scalar_lea.vmem [#allocation9], %s795
        // Predicated region
        $region64: #{tpu_custom_call.1} parent=47 // pred_check
          %p797 = pneg %p197
        $region65: #{tpu_custom_call.1} parent=47 // pred_check_branch
          %799 = sbr.rel (%p797) target = $region67
        $region66: #{tpu_custom_call.1} parent=47 // pred_region
          %s801 = ssub.s32 1024, 1024
          %802 = vsyncadd %s793, %s801
          %s803 = smul.addr %s27, 8
          %s804 = smul.addr %s803, 128
          %s805 = scalar_lea.hbm %s7, %s804
          %s806 = sshll.u32 %s796, 4
          %s807 = int_to_ptr.vmem [resolvable:$true] %s806
          %812 = dma.vmem_to_hbm [thread:$0]  %s807, 1024, %s805, %s793, 128, 128, 8
        $region67: #{tpu_custom_call.1} parent=47 // pred_fallthru
          _
      $region48: #{tpu_custom_call.1} parent=5 // pred_fallthru
        _
      %p813 = scmp.le.s32.totalorder 2, %s22
      // Predicated region
      $region68: #{tpu_custom_call.1} parent=5 // pred_check
        %p814 = pneg %p813
      $region69: #{tpu_custom_call.1} parent=5 // pred_check_branch
        %816 = sbr.rel (%p814) target = $region71
      $region70: #{tpu_custom_call.1} parent=5 // pred_region
        %s817 = ssub.s32 %s22, 2
        // Predicated region
        $region72: #{tpu_custom_call.1} parent=70 // pred_check
          %p818 = pneg %p203
        $region73: #{tpu_custom_call.1} parent=70 // pred_check_branch
          %820 = sbr.rel (%p818) target = $region75
        $region74: #{tpu_custom_call.1} parent=70 // pred_region
          %s821 = sand.u32 %s188, 1
          %s822 = scalar_lea.sflag [#allocation6], %s821
          %s823 = sand.u32 %s188, 1
          %s824 = smul.addr %s823, 64
          %s825 = scalar_lea.vmem [#allocation9], %s824
          %826 = dma.done %s822, 1024
        $region75: #{tpu_custom_call.1} parent=70 // pred_fallthru
          _
      $region71: #{tpu_custom_call.1} parent=5 // pred_fallthru
        _
    $region6: #{tpu_custom_call.1} parent=1 // loop_footer
      %s26 = sadd.s32 1, %s22
    $region7: #{tpu_custom_call.1} parent=1 // loop_footer_branch
      %21 = sbr.rel target = $region3
    $region8: #{tpu_custom_call.1} parent=1 // loop_exit
      _
    %827 = vsyncpa [#allocation5], 1
    %s828 = scalar_lea.sflag [#allocation5], 1
    %829 = vsyncpa %s828, 1
    %830 = vsyncpa [#allocation6], 1
    %s831 = scalar_lea.sflag [#allocation6], 1
    %832 = vsyncpa %s831, 1
    %833 = vsyncpa [#allocation7], 1
    %s834 = scalar_lea.sflag [#allocation7], 1
    %835 = vsyncpa %s834, 1

</llo_original>
